<compile_context>
chip_gen: v7x
topology: tpu7x:2x2x1
jax: 0.10.0
libtpu: 0.0.40
codegen_flags: <defaults>
</compile_context>

<pallas_src>
import functools

import jax
import jax.numpy as jnp
from jax.experimental import pallas as pl
from jax.experimental.pallas import tpu as pltpu


def _round_up(x, m):
    return ((x + m - 1) // m) * m


def _choose_graphs_per_step(B, N, rows_target=256):
    """Largest divisor G of B with G*N <= rows_target (fills MXU rows).

    TODO(synk): on v7x prefer an even number of grid steps (2 TensorCores);
    fold/pad the batch tail when B has no suitable divisor.
    """
    best = 1
    for g in range(1, B + 1):
        if B % g == 0 and g * N <= rows_target:
            best = g
    return best


# ----------------------------------------------------------------------------
# Pallas kernel: GraphLayer forward for a block of G graphs (one grid step)
# ----------------------------------------------------------------------------
def graph_layer_kernel(feature_ref, adj_ref, enc_w_ref, enc_b_ref,
                       w_zr_ref, b_zr_ref, w_h_ref, b_h_ref, out_ref,
                       *, gru_step, d_pad):
    f32 = jnp.float32
    G, N, _ = adj_ref.shape
    rows = G * N                               # == feature_ref.shape[0]

    feature = feature_ref[...]                 # [G*N, Din]   (Din unpadded)
    adj = adj_ref[...]                         # [G, N, N]
    enc_w = enc_w_ref[...]                     # [Din, Dp]
    enc_b = enc_b_ref[...]                     # [1, Dp]
    w_zr = w_zr_ref[...]                       # [2Dp, 2Dp]  rows: [a ; x], cols: [z | r]
    b_zr = b_zr_ref[...]                       # [1, 2Dp]
    w_h = w_h_ref[...]                         # [2Dp, Dp]   rows: [a ; r*x]
    b_h = b_h_ref[...]                         # [1, Dp]

    # encode: tanh(feature @ W_enc + b_enc) -- all G graphs' nodes in one pass.
    x0 = jnp.tanh(jnp.dot(feature, enc_w, preferred_element_type=f32) + enc_b)

    def step(_, x):                            # x: [G*N, Dp]
        # Message passing stays per-graph (block-diagonal adjacency).
        a = jnp.einsum("gij,gjd->gid", adj, x.reshape(G, N, d_pad),
                       preferred_element_type=f32).reshape(rows, d_pad)
        # Fused z/r gates: single matmul contracting over 2*Dp (fills the
        # 256-wide MXU on v6e/v7x) and no separate ga+gx VPU add.
        zr = jax.nn.sigmoid(
            jnp.dot(jnp.concatenate([a, x], axis=-1), w_zr,
                    preferred_element_type=f32) + b_zr)
        z = zr[:, :d_pad]
        r = zr[:, d_pad:]
        h = jnp.tanh(
            jnp.dot(jnp.concatenate([a, r * x], axis=-1), w_h,
                    preferred_element_type=f32) + b_h)
        return x + z * (h - x)                 # == h*z + x*(1-z)

    x = jax.lax.fori_loop(0, gru_step, step, x0, unroll=True)
    out_ref[...] = x.astype(out_ref.dtype)


# ----------------------------------------------------------------------------
# One-time parameter preparation (hoisted out of the per-call forward path)
# ----------------------------------------------------------------------------
def prepare_graph_layer_params(enc_w, enc_b, gru_w, gru_b):
    """Fuse + lane-pad the GraphLayer weights ONCE (init time, not per call).

    gru_w: [6, D, D] stacked as (z0, z1, r0, r1, h0, h1); gru_b: [6, D].
    Zero padding is exact: padded weight cols / biases keep padded lanes of the
    state at 0 through every step (padded z/r become 0.5 but multiply h-x = 0).
    """
    f32 = jnp.float32
    D = enc_w.shape[1]
    Dp = _round_up(D, 128)

    def pad_w(w):                              # [D, D] -> [Dp, Dp]
        return jnp.pad(w.astype(f32), ((0, Dp - D), (0, Dp - D)))

    def pad_b(v):                              # [D] -> [1, Dp]
        return jnp.pad(v.reshape(1, D).astype(f32), ((0, 0), (0, Dp - D)))

    z0, z1, r0, r1, h0, h1 = (gru_w[i] for i in range(6))
    bz0, bz1, br0, br1, bh0, bh1 = (gru_b[i] for i in range(6))

    # [a | x] @ W_zr : rows 0..Dp multiply `a`, rows Dp..2Dp multiply `x`;
    #                  cols 0..Dp are the z gate, cols Dp..2Dp the r gate.
    w_zr = jnp.block([[pad_w(z0), pad_w(r0)],
                      [pad_w(z1), pad_w(r1)]])                    # [2Dp, 2Dp]
    b_zr = jnp.concatenate([pad_b(bz0 + bz1), pad_b(br0 + br1)], axis=1)
    # [a | r*x] @ W_h
    w_h = jnp.concatenate([pad_w(h0), pad_w(h1)], axis=0)         # [2Dp, Dp]
    b_h = pad_b(bh0 + bh1)

    enc_w_p = jnp.pad(enc_w.astype(f32), ((0, 0), (0, Dp - D)))   # [Din, Dp]
    enc_b_p = pad_b(enc_b)

    return dict(enc_w=enc_w_p, enc_b=enc_b_p, w_zr=w_zr, b_zr=b_zr,
                w_h=w_h, b_h=b_h)


# ----------------------------------------------------------------------------
# Forward wrapper: grids over graph blocks, launches the Pallas kernel
# ----------------------------------------------------------------------------
def graph_layer_forward(feature, adj, params, *, gru_step=2,
                        graphs_per_step=None, trim_to=None):
    """GraphLayer forward. `params` comes from prepare_graph_layer_params().

    Returns [B, N, Dp] lane-dense output, trimmed to [B, N, trim_to] if given.
    Downstream fused consumers should pass trim_to=None to keep the padded
    layout and avoid an extra HBM read+write of the activations.
    """
    f32 = jnp.float32
    B, N, Din = feature.shape
    Dp = params["enc_w"].shape[1]

    feature = feature.astype(f32)
    adj = adj.astype(f32)

    if graphs_per_step is None:
        graphs_per_step = _choose_graphs_per_step(B, N)
    G = graphs_per_step
    assert B % G == 0, "graphs_per_step must divide the batch"
    num_steps = B // G

    # Free (metadata-only) reshape so the kernel sees a 2-D row slab of nodes.
    feature2d = feature.reshape(B * N, Din)

    kernel = functools.partial(graph_layer_kernel, gru_step=gru_step, d_pad=Dp)

    # Weights use a constant index_map -> DMA'd once, kept resident in VMEM.
    # TODO(synk): on v7x mark these pipeline_mode=pl.Buffered(1) (or DMA once
    # into scratch); at D<=128 the double-buffered duplicate is <1 MiB, so the
    # default buffering is kept here for lowering robustness.
    const = lambda shape: pl.BlockSpec(shape, lambda b: (0, 0))

    flops = B * (2 * N * Din * Dp
                 + gru_step * (2 * N * N * Dp                 # adj @ x
                               + 2 * N * (2 * Dp) * (2 * Dp)  # [a|x]   @ W_zr
                               + 2 * N * (2 * Dp) * Dp))      # [a|r*x] @ W_h
    transcendentals = B * N * Dp * (1 + 3 * gru_step)
    bytes_accessed = 4 * (feature.size + adj.size + B * N * Dp
                          + sum(int(v.size) for v in params.values()))

    out2d = pl.pallas_call(
        kernel,
        out_shape=jax.ShapeDtypeStruct((B * N, Dp), f32),
        grid=(num_steps,),
        in_specs=[
            pl.BlockSpec((G * N, Din), lambda b: (b, 0)),     # feature (Din unpadded)
            pl.BlockSpec((G, N, N), lambda b: (b, 0, 0)),     # adj
            const(params["enc_w"].shape),
            const(params["enc_b"].shape),
            const(params["w_zr"].shape),
            const(params["b_zr"].shape),
            const(params["w_h"].shape),
            const(params["b_h"].shape),
        ],
        out_specs=pl.BlockSpec((G * N, Dp), lambda b: (b, 0)),
        compiler_params=pltpu.CompilerParams(
            dimension_semantics=("parallel",),
            # Plenty for these shapes; keep well below v7x's 64 MiB physical
            # VMEM when scaling N / D (tile adj or load it bf16 at large N).
            vmem_limit_bytes=32 * 1024 * 1024,
        ),
        cost_estimate=pl.CostEstimate(
            flops=int(flops),
            transcendentals=int(transcendentals),
            bytes_accessed=int(bytes_accessed)),
    )(feature2d, adj, params["enc_w"], params["enc_b"],
      params["w_zr"], params["b_zr"], params["w_h"], params["b_h"])

    out = out2d.reshape(B, N, Dp)
    if trim_to is not None and trim_to != Dp:
        out = out[:, :, :trim_to]
    return out


# ----------------------------------------------------------------------------
# Deterministic parameter init (glorot uniform, like the torch module)
# ----------------------------------------------------------------------------
def glorot(key, shape):
    fan_in, fan_out = shape[-2], shape[-1]
    limit = jnp.sqrt(6.0 / (fan_in + fan_out))
    return jax.random.uniform(key, shape, jnp.float32, -limit, limit)


# ----------------------------------------------------------------------------
# Pure-JAX reference (matches the PyTorch module op-for-op, batched).
# precision=HIGHEST pinned so the reference is true-f32 accurate.
# ----------------------------------------------------------------------------
def reference_forward(feature, adj, enc_w, enc_b, gru_w, gru_b, gru_step=2):
    mm = functools.partial(jnp.matmul, precision=jax.lax.Precision.HIGHEST)
    x = jnp.tanh(mm(feature, enc_w) + enc_b)
    for _ in range(gru_step):
        a = mm(adj, x)
        z = jax.nn.sigmoid(mm(a, gru_w[0]) + gru_b[0] + mm(x, gru_w[1]) + gru_b[1])
        r = jax.nn.sigmoid(mm(a, gru_w[2]) + gru_b[2] + mm(x, gru_w[3]) + gru_b[3])
        h = jnp.tanh(mm(a, gru_w[4]) + gru_b[4] + mm(r * x, gru_w[5]) + gru_b[5])
        x = h * z + x * (1.0 - z)
    return x


if __name__ == "__main__":
    # Small shapes: B=2 graphs, N=16 nodes, input_dim=8, output_dim=32, gru_step=2
    B, N, Din, Dout, GRU_STEP = 2, 16, 8, 32, 2

    key = jax.random.PRNGKey(0)
    k_feat, k_adj, k_enc, *k_gru = jax.random.split(key, 3 + 6)

    feature = jax.random.normal(k_feat, (B, N, Din), jnp.float32)
    adj = jax.random.uniform(k_adj, (B, N, N), jnp.float32)

    enc_w = glorot(k_enc, (Din, Dout))
    enc_b = jnp.zeros((Dout,), jnp.float32)
    # z0, z1, r0, r1, h0, h1 weights stacked: [6, Dout, Dout]
    gru_w = jnp.stack([glorot(k, (Dout, Dout)) for k in k_gru], axis=0)
    gru_b = jnp.zeros((6, Dout), jnp.float32)

    # Fused / padded weights are prepared ONCE at init (hoisted out of forward).
    params = prepare_graph_layer_params(enc_w, enc_b, gru_w, gru_b)

    fwd = jax.jit(functools.partial(graph_layer_forward,
                                    gru_step=GRU_STEP, trim_to=Dout))
    out = jax.block_until_ready(fwd(feature, adj, params))

    ref = reference_forward(feature, adj, enc_w, enc_b, gru_w, gru_b,
                            gru_step=GRU_STEP)

    assert out.shape == (B, N, Dout)
    assert jnp.allclose(out, ref, atol=1e-5, rtol=1e-5), (
        f"max abs err = {jnp.max(jnp.abs(out - ref))}")

    print("KERNEL_OK")
</pallas_src>

<mosaic_0001>
module attributes {stable_mosaic.version = 11 : i64} {
  func.func @graph_layer_kernel(%arg0: i32, %arg1: memref<32x8xf32, #tpu.memory_space<vmem>>, %arg2: memref<2x16x16xf32, #tpu.memory_space<vmem>>, %arg3: memref<8x128xf32, #tpu.memory_space<vmem>>, %arg4: memref<1x128xf32, #tpu.memory_space<vmem>>, %arg5: memref<256x256xf32, #tpu.memory_space<vmem>>, %arg6: memref<1x256xf32, #tpu.memory_space<vmem>>, %arg7: memref<256x128xf32, #tpu.memory_space<vmem>>, %arg8: memref<1x128xf32, #tpu.memory_space<vmem>>, %arg9: memref<32x128xf32, #tpu.memory_space<vmem>>) attributes {dimension_semantics = [#tpu.dimension_semantics<parallel>], iteration_bounds = array<i64: 1>, scalar_prefetch = 0 : i64, scratch_operands = 0 : i64, tpu.core_type = #tpu.core_type<tc>, window_params = [{transform_indices = @transform_0, window_bounds = array<i64: 32, 8>}, {transform_indices = @transform_1, window_bounds = array<i64: 2, 16, 16>}, {pipeline_mode = #tpu.pipeline_mode<synchronous>, transform_indices = @transform_2, window_bounds = array<i64: 8, 128>}, {pipeline_mode = #tpu.pipeline_mode<synchronous>, transform_indices = @transform_3, window_bounds = array<i64: 1, 128>}, {pipeline_mode = #tpu.pipeline_mode<synchronous>, transform_indices = @transform_4, window_bounds = array<i64: 256, 256>}, {pipeline_mode = #tpu.pipeline_mode<synchronous>, transform_indices = @transform_5, window_bounds = array<i64: 1, 256>}, {pipeline_mode = #tpu.pipeline_mode<synchronous>, transform_indices = @transform_6, window_bounds = array<i64: 256, 128>}, {pipeline_mode = #tpu.pipeline_mode<synchronous>, transform_indices = @transform_7, window_bounds = array<i64: 1, 128>}, {transform_indices = @transform_8, window_bounds = array<i64: 32, 128>}]} {
    %c0 = arith.constant 0 : index
    %c0_0 = arith.constant 0 : index
    %0 = vector.load %arg1[%c0, %c0_0] : memref<32x8xf32, #tpu.memory_space<vmem>>, vector<32x8xf32>
    %c0_1 = arith.constant 0 : index
    %c0_2 = arith.constant 0 : index
    %c0_3 = arith.constant 0 : index
    %1 = vector.load %arg2[%c0_1, %c0_2, %c0_3] : memref<2x16x16xf32, #tpu.memory_space<vmem>>, vector<2x16x16xf32>
    %c0_4 = arith.constant 0 : index
    %c0_5 = arith.constant 0 : index
    %2 = vector.load %arg3[%c0_4, %c0_5] : memref<8x128xf32, #tpu.memory_space<vmem>>, vector<8x128xf32>
    %c0_6 = arith.constant 0 : index
    %c0_7 = arith.constant 0 : index
    %3 = vector.load %arg4[%c0_6, %c0_7] : memref<1x128xf32, #tpu.memory_space<vmem>>, vector<1x128xf32>
    %c0_8 = arith.constant 0 : index
    %c0_9 = arith.constant 0 : index
    %4 = vector.load %arg5[%c0_8, %c0_9] : memref<256x256xf32, #tpu.memory_space<vmem>>, vector<256x256xf32>
    %c0_10 = arith.constant 0 : index
    %c0_11 = arith.constant 0 : index
    %5 = vector.load %arg6[%c0_10, %c0_11] : memref<1x256xf32, #tpu.memory_space<vmem>>, vector<1x256xf32>
    %c0_12 = arith.constant 0 : index
    %c0_13 = arith.constant 0 : index
    %6 = vector.load %arg7[%c0_12, %c0_13] : memref<256x128xf32, #tpu.memory_space<vmem>>, vector<256x128xf32>
    %c0_14 = arith.constant 0 : index
    %c0_15 = arith.constant 0 : index
    %7 = vector.load %arg8[%c0_14, %c0_15] : memref<1x128xf32, #tpu.memory_space<vmem>>, vector<1x128xf32>
    %cst = arith.constant dense<0.000000e+00> : vector<32x128xf32>
    %8 = tpu.matmul %0, %2, %cst {dimension_numbers = #tpu.dot_dimension_numbers<[1], [0], [0], [1], [0, 0, 1, 1], [], []>} : vector<32x8xf32>, vector<8x128xf32>, vector<32x128xf32> -> vector<32x128xf32>
    %9 = vector.broadcast %3 : vector<1x128xf32> to vector<32x128xf32>
    %10 = arith.addf %8, %9 : vector<32x128xf32>
    %11 = math.tanh %10 : vector<32x128xf32>
    %c0_i32 = arith.constant 0 : i32
    %12 = vector.shape_cast %11 : vector<32x128xf32> to vector<2x16x128xf32>
    "tpu.trace_start"() <{level = 10 : i32, message = "gij,gjd->gid"}> : () -> ()
    %cst_16 = arith.constant dense<0.000000e+00> : vector<2x16x128xf32>
    %13 = tpu.matmul %1, %12, %cst_16 {dimension_numbers = #tpu.dot_dimension_numbers<[2], [1], [1], [2], [0, 0, 0, 1, 1, 2], [0], [0]>} : vector<2x16x16xf32>, vector<2x16x128xf32>, vector<2x16x128xf32> -> vector<2x16x128xf32>
    "tpu.trace_stop"() : () -> ()
    %14 = vector.shape_cast %13 : vector<2x16x128xf32> to vector<32x128xf32>
    %15 = tpu.concatenate %14, %11 in 1 : vector<32x128xf32>, vector<32x128xf32> -> vector<32x256xf32>
    %cst_17 = arith.constant dense<0.000000e+00> : vector<32x256xf32>
    %16 = tpu.matmul %15, %4, %cst_17 {dimension_numbers = #tpu.dot_dimension_numbers<[1], [0], [0], [1], [0, 0, 1, 1], [], []>} : vector<32x256xf32>, vector<256x256xf32>, vector<32x256xf32> -> vector<32x256xf32>
    %17 = vector.broadcast %5 : vector<1x256xf32> to vector<32x256xf32>
    %18 = arith.addf %16, %17 : vector<32x256xf32>
    %19 = arith.negf %18 : vector<32x256xf32>
    %20 = math.exp %19 : vector<32x256xf32>
    %cst_18 = arith.constant 1.000000e+00 : f32
    %21 = vector.broadcast %cst_18 : f32 to vector<32x256xf32>
    %22 = arith.addf %21, %20 : vector<32x256xf32>
    %23 = arith.divf %21, %22 : vector<32x256xf32>
    %24 = vector.extract_strided_slice %23 {offsets = [0, 0], sizes = [32, 128], strides = [1, 1]} : vector<32x256xf32> to vector<32x128xf32>
    %25 = vector.extract_strided_slice %23 {offsets = [0, 128], sizes = [32, 128], strides = [1, 1]} : vector<32x256xf32> to vector<32x128xf32>
    %26 = arith.mulf %25, %11 : vector<32x128xf32>
    %27 = tpu.concatenate %14, %26 in 1 : vector<32x128xf32>, vector<32x128xf32> -> vector<32x256xf32>
    %cst_19 = arith.constant dense<0.000000e+00> : vector<32x128xf32>
    %28 = tpu.matmul %27, %6, %cst_19 {dimension_numbers = #tpu.dot_dimension_numbers<[1], [0], [0], [1], [0, 0, 1, 1], [], []>} : vector<32x256xf32>, vector<256x128xf32>, vector<32x128xf32> -> vector<32x128xf32>
    %29 = vector.broadcast %7 : vector<1x128xf32> to vector<32x128xf32>
    %30 = arith.addf %28, %29 : vector<32x128xf32>
    %31 = math.tanh %30 : vector<32x128xf32>
    %32 = arith.subf %31, %11 : vector<32x128xf32>
    %33 = arith.mulf %24, %32 : vector<32x128xf32>
    %34 = arith.addf %11, %33 : vector<32x128xf32>
    %c1_i32 = arith.constant 1 : i32
    %35 = vector.shape_cast %34 : vector<32x128xf32> to vector<2x16x128xf32>
    "tpu.trace_start"() <{level = 10 : i32, message = "gij,gjd->gid"}> : () -> ()
    %cst_20 = arith.constant dense<0.000000e+00> : vector<2x16x128xf32>
    %36 = tpu.matmul %1, %35, %cst_20 {dimension_numbers = #tpu.dot_dimension_numbers<[2], [1], [1], [2], [0, 0, 0, 1, 1, 2], [0], [0]>} : vector<2x16x16xf32>, vector<2x16x128xf32>, vector<2x16x128xf32> -> vector<2x16x128xf32>
    "tpu.trace_stop"() : () -> ()
    %37 = vector.shape_cast %36 : vector<2x16x128xf32> to vector<32x128xf32>
    %38 = tpu.concatenate %37, %34 in 1 : vector<32x128xf32>, vector<32x128xf32> -> vector<32x256xf32>
    %cst_21 = arith.constant dense<0.000000e+00> : vector<32x256xf32>
    %39 = tpu.matmul %38, %4, %cst_21 {dimension_numbers = #tpu.dot_dimension_numbers<[1], [0], [0], [1], [0, 0, 1, 1], [], []>} : vector<32x256xf32>, vector<256x256xf32>, vector<32x256xf32> -> vector<32x256xf32>
    %40 = vector.broadcast %5 : vector<1x256xf32> to vector<32x256xf32>
    %41 = arith.addf %39, %40 : vector<32x256xf32>
    %42 = arith.negf %41 : vector<32x256xf32>
    %43 = math.exp %42 : vector<32x256xf32>
    %cst_22 = arith.constant 1.000000e+00 : f32
    %44 = vector.broadcast %cst_22 : f32 to vector<32x256xf32>
    %45 = arith.addf %44, %43 : vector<32x256xf32>
    %46 = arith.divf %44, %45 : vector<32x256xf32>
    %47 = vector.extract_strided_slice %46 {offsets = [0, 0], sizes = [32, 128], strides = [1, 1]} : vector<32x256xf32> to vector<32x128xf32>
    %48 = vector.extract_strided_slice %46 {offsets = [0, 128], sizes = [32, 128], strides = [1, 1]} : vector<32x256xf32> to vector<32x128xf32>
    %49 = arith.mulf %48, %34 : vector<32x128xf32>
    %50 = tpu.concatenate %37, %49 in 1 : vector<32x128xf32>, vector<32x128xf32> -> vector<32x256xf32>
    %cst_23 = arith.constant dense<0.000000e+00> : vector<32x128xf32>
    %51 = tpu.matmul %50, %6, %cst_23 {dimension_numbers = #tpu.dot_dimension_numbers<[1], [0], [0], [1], [0, 0, 1, 1], [], []>} : vector<32x256xf32>, vector<256x128xf32>, vector<32x128xf32> -> vector<32x128xf32>
    %52 = vector.broadcast %7 : vector<1x128xf32> to vector<32x128xf32>
    %53 = arith.addf %51, %52 : vector<32x128xf32>
    %54 = math.tanh %53 : vector<32x128xf32>
    %55 = arith.subf %54, %34 : vector<32x128xf32>
    %56 = arith.mulf %47, %55 : vector<32x128xf32>
    %57 = arith.addf %34, %56 : vector<32x128xf32>
    %c0_24 = arith.constant 0 : index
    %c0_25 = arith.constant 0 : index
    %58 = vector.load %arg9[%c0_24, %c0_25] : memref<32x128xf32, #tpu.memory_space<vmem>>, vector<32x128xf32>
    tpu.vector_store %arg9[%c0_24, %c0_25], %57 {strides = array<i32>} : memref<32x128xf32, #tpu.memory_space<vmem>>, vector<32x128xf32>,
    return
  }
  func.func @transform_0(%arg0: i32) -> (i32, i32) {
    %c0_i32 = arith.constant 0 : i32
    %c0_i32_0 = arith.constant 0 : i32
    return %arg0, %c0_i32 : i32, i32
  }
  func.func @transform_1(%arg0: i32) -> (i32, i32, i32) {
    %c0_i32 = arith.constant 0 : i32
    %c0_i32_0 = arith.constant 0 : i32
    %c0_i32_1 = arith.constant 0 : i32
    return %arg0, %c0_i32, %c0_i32_0 : i32, i32, i32
  }
  func.func @transform_2(%arg0: i32) -> (i32, i32) {
    %c0_i32 = arith.constant 0 : i32
    %c0_i32_0 = arith.constant 0 : i32
    %c0_i32_1 = arith.constant 0 : i32
    return %c0_i32, %c0_i32_0 : i32, i32
  }
  func.func @transform_3(%arg0: i32) -> (i32, i32) {
    %c0_i32 = arith.constant 0 : i32
    %c0_i32_0 = arith.constant 0 : i32
    %c0_i32_1 = arith.constant 0 : i32
    return %c0_i32, %c0_i32_0 : i32, i32
  }
  func.func @transform_4(%arg0: i32) -> (i32, i32) {
    %c0_i32 = arith.constant 0 : i32
    %c0_i32_0 = arith.constant 0 : i32
    %c0_i32_1 = arith.constant 0 : i32
    return %c0_i32, %c0_i32_0 : i32, i32
  }
  func.func @transform_5(%arg0: i32) -> (i32, i32) {
    %c0_i32 = arith.constant 0 : i32
    %c0_i32_0 = arith.constant 0 : i32
    %c0_i32_1 = arith.constant 0 : i32
    return %c0_i32, %c0_i32_0 : i32, i32
  }
  func.func @transform_6(%arg0: i32) -> (i32, i32) {
    %c0_i32 = arith.constant 0 : i32
    %c0_i32_0 = arith.constant 0 : i32
    %c0_i32_1 = arith.constant 0 : i32
    return %c0_i32, %c0_i32_0 : i32, i32
  }
  func.func @transform_7(%arg0: i32) -> (i32, i32) {
    %c0_i32 = arith.constant 0 : i32
    %c0_i32_0 = arith.constant 0 : i32
    %c0_i32_1 = arith.constant 0 : i32
    return %c0_i32, %c0_i32_0 : i32, i32
  }
  func.func @transform_8(%arg0: i32) -> (i32, i32) {
    %c0_i32 = arith.constant 0 : i32
    %c0_i32_0 = arith.constant 0 : i32
    return %arg0, %c0_i32 : i32, i32
  }
}

</mosaic_0001>

<llo_original>
// kernel: graph_layer_forward.1
$region0: #{graph_layer_forward.1}
  #allocation0 [shape = 'u32[]', space=smem, size = 0x4, offset = 0x4, fixed_abs, tag = 'smem constant byte address 0x4 - core index']
  #allocation1 [shape = 'u32[144,128]{1,0:T(1,128)}', space=vmem, size = 0x12000, scoped, tag = 'internal scratch']
  %s0 = inlined_call_operand.vmem [shape: f32[32,8], index: 0, kind: input, shape index: {}]
  %s1 = inlined_call_operand.vmem [shape: f32[2,16,16], index: 1, kind: input, shape index: {}]
  %s2 = inlined_call_operand.vmem [shape: f32[8,128], index: 2, kind: input, shape index: {}]
  %s3 = inlined_call_operand.vmem [shape: f32[1,128], index: 3, kind: input, shape index: {}]
  %s4 = inlined_call_operand.hbm [shape: f32[256,256], index: 4, kind: input, shape index: {}]
  %s5 = inlined_call_operand.vmem [shape: f32[1,256], index: 5, kind: input, shape index: {}]
  %s6 = inlined_call_operand.hbm [shape: f32[256,128], index: 6, kind: input, shape index: {}]
  %s7 = inlined_call_operand.vmem [shape: f32[1,128], index: 7, kind: input, shape index: {}]
  %s8 = inlined_call_operand.hbm [shape: f32[32,128], index: 8, kind: output, shape index: {}]
  %s9 = sld [smem:[#allocation0]]
  $region50: #{graph_layer_forward.1} parent=0
    _
  %s11 = ssub.s32 1, %s9
  %s12 = scalar_select 0, %s11, %s9
  $region1: #{graph_layer_forward.1} parent=0
    #allocation2 [shape = 'u8[262144]{0}', space=vmem, size = 0x40000, scoped, tag = 'input window, operand 4, single buffered']
    #allocation3 [shape = 's32[1]{0}', space=sflag, size = 0x4, scoped, tag = 'scoped memory for graph_layer_forward.1']
    #allocation4 [shape = 's32[1]{0}', space=sflag, size = 0x4, scoped, tag = 'scoped memory for graph_layer_forward.1']
    #allocation5 [shape = 'u8[131072]{0}', space=vmem, size = 0x20000, scoped, tag = 'input window, operand 6, single buffered']
    #allocation6 [shape = 's32[1]{0}', space=sflag, size = 0x4, scoped, tag = 'scoped memory for graph_layer_forward.1']
    #allocation7 [shape = 'u8[16384]{0}', space=vmem, size = 0x4000, scoped, tag = 'output window, operand 0, single buffered']
    %13 = vsyncpa [#allocation3], 0
    %14 = vsyncpa [#allocation6], 0
    %15 = vsyncpa [#allocation4], 0
    // Predicated region
    $region2: #{graph_layer_forward.1} parent=1 // pred_check
      _
    $region3: #{graph_layer_forward.1} parent=1 // pred_check_branch
      %17 = sbr.rel (0) target = $region5
    $region4: #{graph_layer_forward.1} parent=1 // pred_region
      _
    $region5: #{graph_layer_forward.1} parent=1 // pred_fallthru
      _
    // Predicated region
    $region6: #{graph_layer_forward.1} parent=1 // pred_check
      _
    $region7: #{graph_layer_forward.1} parent=1 // pred_check_branch
      %19 = sbr.rel (0) target = $region9
    $region8: #{graph_layer_forward.1} parent=1 // pred_region
      _
    $region9: #{graph_layer_forward.1} parent=1 // pred_fallthru
      _
    // Predicated region
    $region10: #{graph_layer_forward.1} parent=1 // pred_check
      _
    $region11: #{graph_layer_forward.1} parent=1 // pred_check_branch
      %21 = sbr.rel (0) target = $region13
    $region12: #{graph_layer_forward.1} parent=1 // pred_region
      _
    $region13: #{graph_layer_forward.1} parent=1 // pred_fallthru
      _
    // Predicated region
    $region14: #{graph_layer_forward.1} parent=1 // pred_check
      _
    $region15: #{graph_layer_forward.1} parent=1 // pred_check_branch
      %23 = sbr.rel (0) target = $region17
    $region16: #{graph_layer_forward.1} parent=1 // pred_region
      _
    $region17: #{graph_layer_forward.1} parent=1 // pred_fallthru
      _
    // Predicated region
    $region18: #{graph_layer_forward.1} parent=1 // pred_check
      _
    $region19: #{graph_layer_forward.1} parent=1 // pred_check_branch
      %25 = sbr.rel (0) target = $region21
    $region20: #{graph_layer_forward.1} parent=1 // pred_region
      %s27 = ssub.s32 8192, 8192
      %28 = vsyncadd [#allocation3], %s27
      %s29 = sshll.u32 [#allocation2], 4
      %s30 = int_to_ptr.vmem [resolvable:$true] %s29
      %35 = dma.hbm_to_vmem [thread:$0]  %s4, 8192, %s30, [#allocation3], 256, 256, 16
    $region21: #{graph_layer_forward.1} parent=1 // pred_fallthru
      _
    // Predicated region
    $region22: #{graph_layer_forward.1} parent=1 // pred_check
      _
    $region23: #{graph_layer_forward.1} parent=1 // pred_check_branch
      %37 = sbr.rel (0) target = $region25
    $region24: #{graph_layer_forward.1} parent=1 // pred_region
      _
    $region25: #{graph_layer_forward.1} parent=1 // pred_fallthru
      _
    // Predicated region
    $region26: #{graph_layer_forward.1} parent=1 // pred_check
      _
    $region27: #{graph_layer_forward.1} parent=1 // pred_check_branch
      %39 = sbr.rel (0) target = $region29
    $region28: #{graph_layer_forward.1} parent=1 // pred_region
      %s41 = ssub.s32 4096, 4096
      %42 = vsyncadd [#allocation6], %s41
      %s43 = sshll.u32 [#allocation5], 4
      %s44 = int_to_ptr.vmem [resolvable:$true] %s43
      %49 = dma.hbm_to_vmem [thread:$0]  %s6, 4096, %s44, [#allocation6], 128, 128, 8
    $region29: #{graph_layer_forward.1} parent=1 // pred_fallthru
      _
    // Predicated region
    $region30: #{graph_layer_forward.1} parent=1 // pred_check
      _
    $region31: #{graph_layer_forward.1} parent=1 // pred_check_branch
      %51 = sbr.rel (0) target = $region33
    $region32: #{graph_layer_forward.1} parent=1 // pred_region
      _
    $region33: #{graph_layer_forward.1} parent=1 // pred_fallthru
      _
    // Predicated region
    $region34: #{graph_layer_forward.1} parent=1 // pred_check
      _
    $region35: #{graph_layer_forward.1} parent=1 // pred_check_branch
      %53 = sbr.rel (0) target = $region37
    $region36: #{graph_layer_forward.1} parent=1 // pred_region
      %54 = dma.done [#allocation3], 8192
    $region37: #{graph_layer_forward.1} parent=1 // pred_fallthru
      _
    // Predicated region
    $region38: #{graph_layer_forward.1} parent=1 // pred_check
      _
    $region39: #{graph_layer_forward.1} parent=1 // pred_check_branch
      %56 = sbr.rel (0) target = $region41
    $region40: #{graph_layer_forward.1} parent=1 // pred_region
      %57 = dma.done [#allocation6], 4096
    $region41: #{graph_layer_forward.1} parent=1 // pred_fallthru
      _
    %v58 = vld [vmem:[%s0] sm:$0xff]
    %v59 = vld [vmem:[%s0 + $0x8] sm:$0xff]
    %v60 = vld [vmem:[%s0 + $0x10] sm:$0xff]
    %v61 = vld [vmem:[%s0 + $0x18] sm:$0xff]
    %v62 = vld [vmem:[%s1] sm:$0xff]
    %v63 = vld [vmem:[%s1 + $0x8] sm:$0xff]
    %v64 = vld [vmem:[%s1 + $0x10] sm:$0xff]
    %v65 = vld [vmem:[%s1 + $0x18] sm:$0xff]
    %v66 = vld [vmem:[%s2] sm:$0xff]
    %v67 = vld [vmem:[%s3] sm:$0x1]
    %v68 = vld [vmem:[#allocation2] sm:$0xff]
    %v69 = vld [vmem:[#allocation2 + $0x8] sm:$0xff]
    %v70 = vld [vmem:[#allocation2 + $0x10] sm:$0xff]
    %v71 = vld [vmem:[#allocation2 + $0x18] sm:$0xff]
    %v72 = vld [vmem:[#allocation2 + $0x20] sm:$0xff]
    %v73 = vld [vmem:[#allocation2 + $0x28] sm:$0xff]
    %v74 = vld [vmem:[#allocation2 + $0x30] sm:$0xff]
    %v75 = vld [vmem:[#allocation2 + $0x38] sm:$0xff]
    %v76 = vld [vmem:[#allocation2 + $0x40] sm:$0xff]
    %v77 = vld [vmem:[#allocation2 + $0x48] sm:$0xff]
    %v78 = vld [vmem:[#allocation2 + $0x50] sm:$0xff]
    %v79 = vld [vmem:[#allocation2 + $0x58] sm:$0xff]
    %v80 = vld [vmem:[#allocation2 + $0x60] sm:$0xff]
    %v81 = vld [vmem:[#allocation2 + $0x68] sm:$0xff]
    %v82 = vld [vmem:[#allocation2 + $0x70] sm:$0xff]
    %v83 = vld [vmem:[#allocation2 + $0x78] sm:$0xff]
    %v84 = vld [vmem:[#allocation2 + $0x80] sm:$0xff]
    %v85 = vld [vmem:[#allocation2 + $0x88] sm:$0xff]
    %v86 = vld [vmem:[#allocation2 + $0x90] sm:$0xff]
    %v87 = vld [vmem:[#allocation2 + $0x98] sm:$0xff]
    %v88 = vld [vmem:[#allocation2 + $0xa0] sm:$0xff]
    %v89 = vld [vmem:[#allocation2 + $0xa8] sm:$0xff]
    %v90 = vld [vmem:[#allocation2 + $0xb0] sm:$0xff]
    %v91 = vld [vmem:[#allocation2 + $0xb8] sm:$0xff]
    %v92 = vld [vmem:[#allocation2 + $0xc0] sm:$0xff]
    %v93 = vld [vmem:[#allocation2 + $0xc8] sm:$0xff]
    %v94 = vld [vmem:[#allocation2 + $0xd0] sm:$0xff]
    %v95 = vld [vmem:[#allocation2 + $0xd8] sm:$0xff]
    %v96 = vld [vmem:[#allocation2 + $0xe0] sm:$0xff]
    %v97 = vld [vmem:[#allocation2 + $0xe8] sm:$0xff]
    %v98 = vld [vmem:[#allocation2 + $0xf0] sm:$0xff]
    %v99 = vld [vmem:[#allocation2 + $0xf8] sm:$0xff]
    %v100 = vld [vmem:[#allocation2 + $0x100] sm:$0xff]
    %v101 = vld [vmem:[#allocation2 + $0x108] sm:$0xff]
    %v102 = vld [vmem:[#allocation2 + $0x110] sm:$0xff]
    %v103 = vld [vmem:[#allocation2 + $0x118] sm:$0xff]
    %v104 = vld [vmem:[#allocation2 + $0x120] sm:$0xff]
    %v105 = vld [vmem:[#allocation2 + $0x128] sm:$0xff]
    %v106 = vld [vmem:[#allocation2 + $0x130] sm:$0xff]
    %v107 = vld [vmem:[#allocation2 + $0x138] sm:$0xff]
    %v108 = vld [vmem:[#allocation2 + $0x140] sm:$0xff]
    %v109 = vld [vmem:[#allocation2 + $0x148] sm:$0xff]
    %v110 = vld [vmem:[#allocation2 + $0x150] sm:$0xff]
    %v111 = vld [vmem:[#allocation2 + $0x158] sm:$0xff]
    %v112 = vld [vmem:[#allocation2 + $0x160] sm:$0xff]
    %v113 = vld [vmem:[#allocation2 + $0x168] sm:$0xff]
    %v114 = vld [vmem:[#allocation2 + $0x170] sm:$0xff]
    %v115 = vld [vmem:[#allocation2 + $0x178] sm:$0xff]
    %v116 = vld [vmem:[#allocation2 + $0x180] sm:$0xff]
    %v117 = vld [vmem:[#allocation2 + $0x188] sm:$0xff]
    %v118 = vld [vmem:[#allocation2 + $0x190] sm:$0xff]
    %v119 = vld [vmem:[#allocation2 + $0x198] sm:$0xff]
    %v120 = vld [vmem:[#allocation2 + $0x1a0] sm:$0xff]
    %v121 = vld [vmem:[#allocation2 + $0x1a8] sm:$0xff]
    %v122 = vld [vmem:[#allocation2 + $0x1b0] sm:$0xff]
    %v123 = vld [vmem:[#allocation2 + $0x1b8] sm:$0xff]
    %v124 = vld [vmem:[#allocation2 + $0x1c0] sm:$0xff]
    %v125 = vld [vmem:[#allocation2 + $0x1c8] sm:$0xff]
    %v126 = vld [vmem:[#allocation2 + $0x1d0] sm:$0xff]
    %v127 = vld [vmem:[#allocation2 + $0x1d8] sm:$0xff]
    %v128 = vld [vmem:[#allocation2 + $0x1e0] sm:$0xff]
    %v129 = vld [vmem:[#allocation2 + $0x1e8] sm:$0xff]
    %v130 = vld [vmem:[#allocation2 + $0x1f0] sm:$0xff]
    %v131 = vld [vmem:[#allocation2 + $0x1f8] sm:$0xff]
    %v132 = vld [vmem:[%s5] sm:$0x3]
    %v133 = vld [vmem:[#allocation5] sm:$0xff]
    %v134 = vld [vmem:[#allocation5 + $0x8] sm:$0xff]
    %v135 = vld [vmem:[#allocation5 + $0x10] sm:$0xff]
    %v136 = vld [vmem:[#allocation5 + $0x18] sm:$0xff]
    %v137 = vld [vmem:[#allocation5 + $0x20] sm:$0xff]
    %v138 = vld [vmem:[#allocation5 + $0x28] sm:$0xff]
    %v139 = vld [vmem:[#allocation5 + $0x30] sm:$0xff]
    %v140 = vld [vmem:[#allocation5 + $0x38] sm:$0xff]
    %v141 = vld [vmem:[#allocation5 + $0x40] sm:$0xff]
    %v142 = vld [vmem:[#allocation5 + $0x48] sm:$0xff]
    %v143 = vld [vmem:[#allocation5 + $0x50] sm:$0xff]
    %v144 = vld [vmem:[#allocation5 + $0x58] sm:$0xff]
    %v145 = vld [vmem:[#allocation5 + $0x60] sm:$0xff]
    %v146 = vld [vmem:[#allocation5 + $0x68] sm:$0xff]
    %v147 = vld [vmem:[#allocation5 + $0x70] sm:$0xff]
    %v148 = vld [vmem:[#allocation5 + $0x78] sm:$0xff]
    %v149 = vld [vmem:[#allocation5 + $0x80] sm:$0xff]
    %v150 = vld [vmem:[#allocation5 + $0x88] sm:$0xff]
    %v151 = vld [vmem:[#allocation5 + $0x90] sm:$0xff]
    %v152 = vld [vmem:[#allocation5 + $0x98] sm:$0xff]
    %v153 = vld [vmem:[#allocation5 + $0xa0] sm:$0xff]
    %v154 = vld [vmem:[#allocation5 + $0xa8] sm:$0xff]
    %v155 = vld [vmem:[#allocation5 + $0xb0] sm:$0xff]
    %v156 = vld [vmem:[#allocation5 + $0xb8] sm:$0xff]
    %v157 = vld [vmem:[#allocation5 + $0xc0] sm:$0xff]
    %v158 = vld [vmem:[#allocation5 + $0xc8] sm:$0xff]
    %v159 = vld [vmem:[#allocation5 + $0xd0] sm:$0xff]
    %v160 = vld [vmem:[#allocation5 + $0xd8] sm:$0xff]
    %v161 = vld [vmem:[#allocation5 + $0xe0] sm:$0xff]
    %v162 = vld [vmem:[#allocation5 + $0xe8] sm:$0xff]
    %v163 = vld [vmem:[#allocation5 + $0xf0] sm:$0xff]
    %v164 = vld [vmem:[#allocation5 + $0xf8] sm:$0xff]
    %v165 = vld [vmem:[%s7] sm:$0x1]
    %v167 = vlaneseq
    %v168 = vshrl.u32 %v167, 7
    %v169 = vsub.s32 0, %v168
    %v170 = vrot.slane %v67, %v169
    %vm172 = vcmask 64512
    %v174 = vsel %vm172, %v58, 0
    %v177 = vsel %vm172, %v59, 0
    %v180 = vsel %vm172, %v60, 0
    %v183 = vsel %vm172, %v61, 0
    %185 = vmatprep.subr.mxu0 0.0
    %186 = vmatpush1.msra.mxu0 %v66
    %187 = vmatprep.subr.mxu0 0.0
    %188 = vmatpush1.msra.mxu0 0.0
    %189 = vmatprep.subr.mxu0 0.0
    %190 = vmatpush1.msra.mxu0 0.0
    %191 = vmatprep.subr.mxu0 0.0
    %192 = vmatpush1.msra.mxu0 0.0
    %193 = vmatprep.subr.mxu0 0.0
    %194 = vmatpush1.msra.mxu0 0.0
    %195 = vmatprep.subr.mxu0 0.0
    %196 = vmatpush1.msra.mxu0 0.0
    %197 = vmatprep.subr.mxu0 0.0
    %198 = vmatpush1.msra.mxu0 0.0
    %199 = vmatprep.subr.mxu0 0.0
    %200 = vmatpush1.msra.mxu0 0.0
    %201 = vmatprep.subr.mxu0 0.0
    %202 = vmatpush1.msra.mxu0 0.0
    %203 = vmatprep.subr.mxu0 0.0
    %204 = vmatpush1.msra.mxu0 0.0
    %205 = vmatprep.subr.mxu0 0.0
    %206 = vmatpush1.msra.mxu0 0.0
    %207 = vmatprep.subr.mxu0 0.0
    %208 = vmatpush1.msra.mxu0 0.0
    %209 = vmatprep.subr.mxu0 0.0
    %210 = vmatpush1.msra.mxu0 0.0
    %211 = vmatprep.subr.mxu0 0.0
    %212 = vmatpush1.msra.mxu0 0.0
    %213 = vmatprep.subr.mxu0 0.0
    %214 = vmatpush1.msra.mxu0 0.0
    %215 = vmatprep.subr.mxu0 0.0
    %216 = vmatpush1.msra.mxu0 0.0
    %217 = vmatprep.subr.mxu0 0.0
    %218 = vmatpush1.msra.mxu0 0.0
    %219 = vmatprep.subr.mxu0 0.0
    %220 = vmatpush1.msra.mxu0 0.0
    %221 = vmatprep.subr.mxu0 0.0
    %222 = vmatpush1.msra.mxu0 0.0
    %223 = vmatprep.subr.mxu0 0.0
    %224 = vmatpush1.msra.mxu0 0.0
    %225 = vmatprep.subr.mxu0 0.0
    %226 = vmatpush1.msra.mxu0 0.0
    %227 = vmatprep.subr.mxu0 0.0
    %228 = vmatpush1.msra.mxu0 0.0
    %229 = vmatprep.subr.mxu0 0.0
    %230 = vmatpush1.msra.mxu0 0.0
    %231 = vmatprep.subr.mxu0 0.0
    %232 = vmatpush1.msra.mxu0 0.0
    %233 = vmatprep.subr.mxu0 0.0
    %234 = vmatpush1.msra.mxu0 0.0
    %235 = vmatprep.subr.mxu0 0.0
    %236 = vmatpush1.msra.mxu0 0.0
    %237 = vmatprep.subr.mxu0 0.0
    %238 = vmatpush1.msra.mxu0 0.0
    %239 = vmatprep.subr.mxu0 0.0
    %240 = vmatpush1.msra.mxu0 0.0
    %241 = vmatprep.subr.mxu0 0.0
    %242 = vmatpush1.msra.mxu0 0.0
    %243 = vmatprep.subr.mxu0 0.0
    %244 = vmatpush1.msra.mxu0 0.0
    %245 = vmatprep.subr.mxu0 0.0
    %246 = vmatpush1.msra.mxu0 0.0
    %247 = vmatprep.subr.mxu0 0.0
    %248 = vmatpush1.msra.mxu0 0.0
    %249 = vmatprep.mubr.f32.mxu0 0.0
    %250 = vmatmul.mubr.f32.gmra.mrb[0].mxu0 %v174
    %v251 = vpop.f32.mrb[0].mxu0
    %v252 = vadd.f32 %v170, %v251
    %v253 = vpop.f32.mrb[0].mxu0
    %254 = vmatprep.mubr.f32.mxu0 0.0
    %255 = vmatmul.mubr.f32.gmra.mrb[0].mxu0 %v177
    %v256 = vpop.f32.mrb[0].mxu0
    %v257 = vadd.f32 %v170, %v256
    %v258 = vpop.f32.mrb[0].mxu0
    %259 = vmatprep.mubr.f32.mxu0 0.0
    %260 = vmatmul.mubr.f32.gmra.mrb[0].mxu0 %v180
    %v261 = vpop.f32.mrb[0].mxu0
    %v262 = vadd.f32 %v170, %v261
    %v263 = vpop.f32.mrb[0].mxu0
    %264 = vmatprep.mubr.f32.mxu0 0.0
    %265 = vmatmul.mubr.f32.gmra.mrb[0].mxu0 %v183
    %v266 = vpop.f32.mrb[0].mxu0
    %v267 = vadd.f32 %v170, %v266
    %v268 = vpop.f32.mrb[0].mxu0
    %269 = vdwg.mxu0
    %v270 = vtanh.pop %v252
    %v271 = vtanh.pop %v257
    %v272 = vtanh.pop %v262
    %v273 = vtanh.pop %v267
    %vm274 = vcmask 130048
    %v276 = vsel %vm274, %v62, 0
    %v279 = vsel %vm274, %v63, 0
    %281 = vmatprep.subr.mxu0 0.0
    %282 = vmatpush1.msra.mxu0 %v270
    %283 = vmatprep.subr.mxu0 0.0
    %284 = vmatpush1.msra.mxu0 %v271
    %285 = vmatprep.subr.mxu0 0.0
    %286 = vmatpush1.msra.mxu0 0.0
    %287 = vmatprep.subr.mxu0 0.0
    %288 = vmatpush1.msra.mxu0 0.0
    %289 = vmatprep.subr.mxu0 0.0
    %290 = vmatpush1.msra.mxu0 0.0
    %291 = vmatprep.subr.mxu0 0.0
    %292 = vmatpush1.msra.mxu0 0.0
    %293 = vmatprep.subr.mxu0 0.0
    %294 = vmatpush1.msra.mxu0 0.0
    %295 = vmatprep.subr.mxu0 0.0
    %296 = vmatpush1.msra.mxu0 0.0
    %297 = vmatprep.subr.mxu0 0.0
    %298 = vmatpush1.msra.mxu0 0.0
    %299 = vmatprep.subr.mxu0 0.0
    %300 = vmatpush1.msra.mxu0 0.0
    %301 = vmatprep.subr.mxu0 0.0
    %302 = vmatpush1.msra.mxu0 0.0
    %303 = vmatprep.subr.mxu0 0.0
    %304 = vmatpush1.msra.mxu0 0.0
    %305 = vmatprep.subr.mxu0 0.0
    %306 = vmatpush1.msra.mxu0 0.0
    %307 = vmatprep.subr.mxu0 0.0
    %308 = vmatpush1.msra.mxu0 0.0
    %309 = vmatprep.subr.mxu0 0.0
    %310 = vmatpush1.msra.mxu0 0.0
    %311 = vmatprep.subr.mxu0 0.0
    %312 = vmatpush1.msra.mxu0 0.0
    %313 = vmatprep.subr.mxu0 0.0
    %314 = vmatpush1.msra.mxu0 0.0
    %315 = vmatprep.subr.mxu0 0.0
    %316 = vmatpush1.msra.mxu0 0.0
    %317 = vmatprep.subr.mxu0 0.0
    %318 = vmatpush1.msra.mxu0 0.0
    %319 = vmatprep.subr.mxu0 0.0
    %320 = vmatpush1.msra.mxu0 0.0
    %321 = vmatprep.subr.mxu0 0.0
    %322 = vmatpush1.msra.mxu0 0.0
    %323 = vmatprep.subr.mxu0 0.0
    %324 = vmatpush1.msra.mxu0 0.0
    %325 = vmatprep.subr.mxu0 0.0
    %326 = vmatpush1.msra.mxu0 0.0
    %327 = vmatprep.subr.mxu0 0.0
    %328 = vmatpush1.msra.mxu0 0.0
    %329 = vmatprep.subr.mxu0 0.0
    %330 = vmatpush1.msra.mxu0 0.0
    %331 = vmatprep.subr.mxu0 0.0
    %332 = vmatpush1.msra.mxu0 0.0
    %333 = vmatprep.subr.mxu0 0.0
    %334 = vmatpush1.msra.mxu0 0.0
    %335 = vmatprep.subr.mxu0 0.0
    %336 = vmatpush1.msra.mxu0 0.0
    %337 = vmatprep.subr.mxu0 0.0
    %338 = vmatpush1.msra.mxu0 0.0
    %339 = vmatprep.subr.mxu0 0.0
    %340 = vmatpush1.msra.mxu0 0.0
    %341 = vmatprep.subr.mxu0 0.0
    %342 = vmatpush1.msra.mxu0 0.0
    %343 = vmatprep.subr.mxu0 0.0
    %344 = vmatpush1.msra.mxu0 0.0
    %345 = vmatprep.mubr.f32.mxu0 0.0
    %346 = vmatmul.mubr.f32.gmra.mrb[0].mxu0 %v276
    %v347 = vpop.f32.mrb[0].mxu0
    %v348 = vadd.f32 0.0, %v347
    %v349 = vpop.f32.mrb[0].mxu0
    %350 = vmatprep.mubr.f32.mxu0 0.0
    %351 = vmatmul.mubr.f32.gmra.mrb[0].mxu0 %v279
    %v352 = vpop.f32.mrb[0].mxu0
    %v353 = vadd.f32 0.0, %v352
    %v354 = vpop.f32.mrb[0].mxu0
    %355 = vdwg.mxu0
    %v357 = vsel %vm274, %v64, 0
    %v360 = vsel %vm274, %v65, 0
    %362 = vmatprep.subr.mxu0 0.0
    %363 = vmatpush1.msra.mxu0 %v272
    %364 = vmatprep.subr.mxu0 0.0
    %365 = vmatpush1.msra.mxu0 %v273
    %366 = vmatprep.subr.mxu0 0.0
    %367 = vmatpush1.msra.mxu0 0.0
    %368 = vmatprep.subr.mxu0 0.0
    %369 = vmatpush1.msra.mxu0 0.0
    %370 = vmatprep.subr.mxu0 0.0
    %371 = vmatpush1.msra.mxu0 0.0
    %372 = vmatprep.subr.mxu0 0.0
    %373 = vmatpush1.msra.mxu0 0.0
    %374 = vmatprep.subr.mxu0 0.0
    %375 = vmatpush1.msra.mxu0 0.0
    %376 = vmatprep.subr.mxu0 0.0
    %377 = vmatpush1.msra.mxu0 0.0
    %378 = vmatprep.subr.mxu0 0.0
    %379 = vmatpush1.msra.mxu0 0.0
    %380 = vmatprep.subr.mxu0 0.0
    %381 = vmatpush1.msra.mxu0 0.0
    %382 = vmatprep.subr.mxu0 0.0
    %383 = vmatpush1.msra.mxu0 0.0
    %384 = vmatprep.subr.mxu0 0.0
    %385 = vmatpush1.msra.mxu0 0.0
    %386 = vmatprep.subr.mxu0 0.0
    %387 = vmatpush1.msra.mxu0 0.0
    %388 = vmatprep.subr.mxu0 0.0
    %389 = vmatpush1.msra.mxu0 0.0
    %390 = vmatprep.subr.mxu0 0.0
    %391 = vmatpush1.msra.mxu0 0.0
    %392 = vmatprep.subr.mxu0 0.0
    %393 = vmatpush1.msra.mxu0 0.0
    %394 = vmatprep.subr.mxu0 0.0
    %395 = vmatpush1.msra.mxu0 0.0
    %396 = vmatprep.subr.mxu0 0.0
    %397 = vmatpush1.msra.mxu0 0.0
    %398 = vmatprep.subr.mxu0 0.0
    %399 = vmatpush1.msra.mxu0 0.0
    %400 = vmatprep.subr.mxu0 0.0
    %401 = vmatpush1.msra.mxu0 0.0
    %402 = vmatprep.subr.mxu0 0.0
    %403 = vmatpush1.msra.mxu0 0.0
    %404 = vmatprep.subr.mxu0 0.0
    %405 = vmatpush1.msra.mxu0 0.0
    %406 = vmatprep.subr.mxu0 0.0
    %407 = vmatpush1.msra.mxu0 0.0
    %408 = vmatprep.subr.mxu0 0.0
    %409 = vmatpush1.msra.mxu0 0.0
    %410 = vmatprep.subr.mxu0 0.0
    %411 = vmatpush1.msra.mxu0 0.0
    %412 = vmatprep.subr.mxu0 0.0
    %413 = vmatpush1.msra.mxu0 0.0
    %414 = vmatprep.subr.mxu0 0.0
    %415 = vmatpush1.msra.mxu0 0.0
    %416 = vmatprep.subr.mxu0 0.0
    %417 = vmatpush1.msra.mxu0 0.0
    %418 = vmatprep.subr.mxu0 0.0
    %419 = vmatpush1.msra.mxu0 0.0
    %420 = vmatprep.subr.mxu0 0.0
    %421 = vmatpush1.msra.mxu0 0.0
    %422 = vmatprep.subr.mxu0 0.0
    %423 = vmatpush1.msra.mxu0 0.0
    %424 = vmatprep.subr.mxu0 0.0
    %425 = vmatpush1.msra.mxu0 0.0
    %426 = vmatprep.mubr.f32.mxu0 0.0
    %427 = vmatmul.mubr.f32.gmra.mrb[0].mxu0 %v357
    %v428 = vpop.f32.mrb[0].mxu0
    %v429 = vadd.f32 0.0, %v428
    %v430 = vpop.f32.mrb[0].mxu0
    %431 = vmatprep.mubr.f32.mxu0 0.0
    %432 = vmatmul.mubr.f32.gmra.mrb[0].mxu0 %v360
    %v433 = vpop.f32.mrb[0].mxu0
    %v434 = vadd.f32 0.0, %v433
    %v435 = vpop.f32.mrb[0].mxu0
    %436 = vdwg.mxu0
    %v438 = vlaneseq
    %v439 = vshrl.u32 %v438, 7
    %v440 = vsub.s32 0, %v439
    %v441 = vrot.slane %v132, %v440
    %v442 = vlaneseq
    %v443 = vshrl.u32 %v442, 7
    %v444 = vsub.s32 1, %v443
    %v445 = vrot.slane %v132, %v444
    %448 = vmatprep.subr.mxu0 %v69
    %449 = vmatpush1.msra.mxu0 %v68
    %450 = vmatprep.subr.mxu0 %v71
    %451 = vmatpush1.msra.mxu0 %v70
    %452 = vmatprep.subr.mxu0 %v73
    %453 = vmatpush1.msra.mxu0 %v72
    %454 = vmatprep.subr.mxu0 %v75
    %455 = vmatpush1.msra.mxu0 %v74
    %456 = vmatprep.subr.mxu0 %v77
    %457 = vmatpush1.msra.mxu0 %v76
    %458 = vmatprep.subr.mxu0 %v79
    %459 = vmatpush1.msra.mxu0 %v78
    %460 = vmatprep.subr.mxu0 %v81
    %461 = vmatpush1.msra.mxu0 %v80
    %462 = vmatprep.subr.mxu0 %v83
    %463 = vmatpush1.msra.mxu0 %v82
    %464 = vmatprep.subr.mxu0 %v85
    %465 = vmatpush1.msra.mxu0 %v84
    %466 = vmatprep.subr.mxu0 %v87
    %467 = vmatpush1.msra.mxu0 %v86
    %468 = vmatprep.subr.mxu0 %v89
    %469 = vmatpush1.msra.mxu0 %v88
    %470 = vmatprep.subr.mxu0 %v91
    %471 = vmatpush1.msra.mxu0 %v90
    %472 = vmatprep.subr.mxu0 %v93
    %473 = vmatpush1.msra.mxu0 %v92
    %474 = vmatprep.subr.mxu0 %v95
    %475 = vmatpush1.msra.mxu0 %v94
    %476 = vmatprep.subr.mxu0 %v97
    %477 = vmatpush1.msra.mxu0 %v96
    %478 = vmatprep.subr.mxu0 %v99
    %479 = vmatpush1.msra.mxu0 %v98
    %480 = vmatprep.subr.mxu0 %v101
    %481 = vmatpush1.msra.mxu0 %v100
    %482 = vmatprep.subr.mxu0 %v103
    %483 = vmatpush1.msra.mxu0 %v102
    %484 = vmatprep.subr.mxu0 %v105
    %485 = vmatpush1.msra.mxu0 %v104
    %486 = vmatprep.subr.mxu0 %v107
    %487 = vmatpush1.msra.mxu0 %v106
    %488 = vmatprep.subr.mxu0 %v109
    %489 = vmatpush1.msra.mxu0 %v108
    %490 = vmatprep.subr.mxu0 %v111
    %491 = vmatpush1.msra.mxu0 %v110
    %492 = vmatprep.subr.mxu0 %v113
    %493 = vmatpush1.msra.mxu0 %v112
    %494 = vmatprep.subr.mxu0 %v115
    %495 = vmatpush1.msra.mxu0 %v114
    %496 = vmatprep.subr.mxu0 %v117
    %497 = vmatpush1.msra.mxu0 %v116
    %498 = vmatprep.subr.mxu0 %v119
    %499 = vmatpush1.msra.mxu0 %v118
    %500 = vmatprep.subr.mxu0 %v121
    %501 = vmatpush1.msra.mxu0 %v120
    %502 = vmatprep.subr.mxu0 %v123
    %503 = vmatpush1.msra.mxu0 %v122
    %504 = vmatprep.subr.mxu0 %v125
    %505 = vmatpush1.msra.mxu0 %v124
    %506 = vmatprep.subr.mxu0 %v127
    %507 = vmatpush1.msra.mxu0 %v126
    %508 = vmatprep.subr.mxu0 %v129
    %509 = vmatpush1.msra.mxu0 %v128
    %510 = vmatprep.subr.mxu0 %v131
    %511 = vmatpush1.msra.mxu0 %v130
    %512 = vmatprep.mubr.f32.mxu0 %v270
    %513 = vmatmul.mubr.f32.gmra.mrb[0].mxu0 %v348
    %v514 = vpop.f32.mrb[0].mxu0
    %v515 = vadd.f32 %v441, %v514
    %v516 = vpop.f32.mrb[0].mxu0
    %v517 = vadd.f32 %v445, %v516
    %518 = vmatprep.mubr.f32.mxu0 %v271
    %519 = vmatmul.mubr.f32.gmra.mrb[0].mxu0 %v353
    %v520 = vpop.f32.mrb[0].mxu0
    %v521 = vadd.f32 %v441, %v520
    %v522 = vpop.f32.mrb[0].mxu0
    %v523 = vadd.f32 %v445, %v522
    %524 = vmatprep.mubr.f32.mxu0 %v272
    %525 = vmatmul.mubr.f32.gmra.mrb[0].mxu0 %v429
    %v526 = vpop.f32.mrb[0].mxu0
    %v527 = vadd.f32 %v441, %v526
    %v528 = vpop.f32.mrb[0].mxu0
    %v529 = vadd.f32 %v445, %v528
    %530 = vmatprep.mubr.f32.mxu0 %v273
    %531 = vmatmul.mubr.f32.gmra.mrb[0].mxu0 %v434
    %v532 = vpop.f32.mrb[0].mxu0
    %v533 = vadd.f32 %v441, %v532
    %v534 = vpop.f32.mrb[0].mxu0
    %v535 = vadd.f32 %v445, %v534
    %536 = vdwg.mxu0
    %v537 = vxor.u32 %v515, 2147483648
    %v538 = vxor.u32 %v517, 2147483648
    %v539 = vxor.u32 %v521, 2147483648
    %v540 = vxor.u32 %v523, 2147483648
    %v541 = vxor.u32 %v527, 2147483648
    %v542 = vxor.u32 %v529, 2147483648
    %v543 = vxor.u32 %v533, 2147483648
    %v544 = vxor.u32 %v535, 2147483648
    %v545 = vmul.f32 %v537, 1.442695
    %v546 = vpow.pop %v545
    %v547 = vmul.f32 %v538, 1.442695
    %v548 = vpow.pop %v547
    %v549 = vmul.f32 %v539, 1.442695
    %v550 = vpow.pop %v549
    %v551 = vmul.f32 %v540, 1.442695
    %v552 = vpow.pop %v551
    %v553 = vmul.f32 %v541, 1.442695
    %v554 = vpow.pop %v553
    %v555 = vmul.f32 %v542, 1.442695
    %v556 = vpow.pop %v555
    %v557 = vmul.f32 %v543, 1.442695
    %v558 = vpow.pop %v557
    %v559 = vmul.f32 %v544, 1.442695
    %v560 = vpow.pop %v559
    %v561 = vadd.f32 %v546, 1.0
    %v562 = vadd.f32 %v548, 1.0
    %v563 = vadd.f32 %v550, 1.0
    %v564 = vadd.f32 %v552, 1.0
    %v565 = vadd.f32 %v554, 1.0
    %v566 = vadd.f32 %v556, 1.0
    %v567 = vadd.f32 %v558, 1.0
    %v568 = vadd.f32 %v560, 1.0
    %v569 = vrcp.pop %v561
    %v570 = vmul.f32 1.0, %v569
    %v571 = vrcp.pop %v562
    %v572 = vmul.f32 1.0, %v571
    %v573 = vrcp.pop %v563
    %v574 = vmul.f32 1.0, %v573
    %v575 = vrcp.pop %v564
    %v576 = vmul.f32 1.0, %v575
    %v577 = vrcp.pop %v565
    %v578 = vmul.f32 1.0, %v577
    %v579 = vrcp.pop %v566
    %v580 = vmul.f32 1.0, %v579
    %v581 = vrcp.pop %v567
    %v582 = vmul.f32 1.0, %v581
    %v583 = vrcp.pop %v568
    %v584 = vmul.f32 1.0, %v583
    %v585 = vmul.f32 %v572, %v270
    %v586 = vmul.f32 %v576, %v271
    %v587 = vmul.f32 %v580, %v272
    %v588 = vmul.f32 %v584, %v273
    %v590 = vlaneseq
    %v591 = vshrl.u32 %v590, 7
    %v592 = vsub.s32 0, %v591
    %v593 = vrot.slane %v165, %v592
    %595 = vmatprep.subr.mxu0 0.0
    %596 = vmatpush1.msra.mxu0 %v133
    %597 = vmatprep.subr.mxu0 0.0
    %598 = vmatpush1.msra.mxu0 %v134
    %599 = vmatprep.subr.mxu0 0.0
    %600 = vmatpush1.msra.mxu0 %v135
    %601 = vmatprep.subr.mxu0 0.0
    %602 = vmatpush1.msra.mxu0 %v136
    %603 = vmatprep.subr.mxu0 0.0
    %604 = vmatpush1.msra.mxu0 %v137
    %605 = vmatprep.subr.mxu0 0.0
    %606 = vmatpush1.msra.mxu0 %v138
    %607 = vmatprep.subr.mxu0 0.0
    %608 = vmatpush1.msra.mxu0 %v139
    %609 = vmatprep.subr.mxu0 0.0
    %610 = vmatpush1.msra.mxu0 %v140
    %611 = vmatprep.subr.mxu0 0.0
    %612 = vmatpush1.msra.mxu0 %v141
    %613 = vmatprep.subr.mxu0 0.0
    %614 = vmatpush1.msra.mxu0 %v142
    %615 = vmatprep.subr.mxu0 0.0
    %616 = vmatpush1.msra.mxu0 %v143
    %617 = vmatprep.subr.mxu0 0.0
    %618 = vmatpush1.msra.mxu0 %v144
    %619 = vmatprep.subr.mxu0 0.0
    %620 = vmatpush1.msra.mxu0 %v145
    %621 = vmatprep.subr.mxu0 0.0
    %622 = vmatpush1.msra.mxu0 %v146
    %623 = vmatprep.subr.mxu0 0.0
    %624 = vmatpush1.msra.mxu0 %v147
    %625 = vmatprep.subr.mxu0 0.0
    %626 = vmatpush1.msra.mxu0 %v148
    %627 = vmatprep.subr.mxu0 0.0
    %628 = vmatpush1.msra.mxu0 %v149
    %629 = vmatprep.subr.mxu0 0.0
    %630 = vmatpush1.msra.mxu0 %v150
    %631 = vmatprep.subr.mxu0 0.0
    %632 = vmatpush1.msra.mxu0 %v151
    %633 = vmatprep.subr.mxu0 0.0
    %634 = vmatpush1.msra.mxu0 %v152
    %635 = vmatprep.subr.mxu0 0.0
    %636 = vmatpush1.msra.mxu0 %v153
    %637 = vmatprep.subr.mxu0 0.0
    %638 = vmatpush1.msra.mxu0 %v154
    %639 = vmatprep.subr.mxu0 0.0
    %640 = vmatpush1.msra.mxu0 %v155
    %641 = vmatprep.subr.mxu0 0.0
    %642 = vmatpush1.msra.mxu0 %v156
    %643 = vmatprep.subr.mxu0 0.0
    %644 = vmatpush1.msra.mxu0 %v157
    %645 = vmatprep.subr.mxu0 0.0
    %646 = vmatpush1.msra.mxu0 %v158
    %647 = vmatprep.subr.mxu0 0.0
    %648 = vmatpush1.msra.mxu0 %v159
    %649 = vmatprep.subr.mxu0 0.0
    %650 = vmatpush1.msra.mxu0 %v160
    %651 = vmatprep.subr.mxu0 0.0
    %652 = vmatpush1.msra.mxu0 %v161
    %653 = vmatprep.subr.mxu0 0.0
    %654 = vmatpush1.msra.mxu0 %v162
    %655 = vmatprep.subr.mxu0 0.0
    %656 = vmatpush1.msra.mxu0 %v163
    %657 = vmatprep.subr.mxu0 0.0
    %658 = vmatpush1.msra.mxu0 %v164
    %659 = vmatprep.mubr.f32.mxu0 %v585
    %660 = vmatmul.mubr.f32.gmra.mrb[0].mxu0 %v348
    %v661 = vpop.f32.mrb[0].mxu0
    %v662 = vadd.f32 %v593, %v661
    %v663 = vpop.f32.mrb[0].mxu0
    %664 = vmatprep.mubr.f32.mxu0 %v586
    %665 = vmatmul.mubr.f32.gmra.mrb[0].mxu0 %v353
    %v666 = vpop.f32.mrb[0].mxu0
    %v667 = vadd.f32 %v593, %v666
    %v668 = vpop.f32.mrb[0].mxu0
    %669 = vmatprep.mubr.f32.mxu0 %v587
    %670 = vmatmul.mubr.f32.gmra.mrb[0].mxu0 %v429
    %v671 = vpop.f32.mrb[0].mxu0
    %v672 = vadd.f32 %v593, %v671
    %v673 = vpop.f32.mrb[0].mxu0
    %674 = vmatprep.mubr.f32.mxu0 %v588
    %675 = vmatmul.mubr.f32.gmra.mrb[0].mxu0 %v434
    %v676 = vpop.f32.mrb[0].mxu0
    %v677 = vadd.f32 %v593, %v676
    %v678 = vpop.f32.mrb[0].mxu0
    %679 = vdwg.mxu0
    %v680 = vtanh.pop %v662
    %v681 = vtanh.pop %v667
    %v682 = vtanh.pop %v672
    %v683 = vtanh.pop %v677
    %v684 = vsub.f32 %v680, %v270
    %v685 = vsub.f32 %v681, %v271
    %v686 = vsub.f32 %v682, %v272
    %v687 = vsub.f32 %v683, %v273
    %v688 = vmul.f32 %v570, %v684
    %v689 = vmul.f32 %v574, %v685
    %v690 = vmul.f32 %v578, %v686
    %v691 = vmul.f32 %v582, %v687
    %v692 = vadd.f32 %v270, %v688
    %v693 = vadd.f32 %v271, %v689
    %v694 = vadd.f32 %v272, %v690
    %v695 = vadd.f32 %v273, %v691
    %696 = vmatprep.subr.mxu0 0.0
    %697 = vmatpush1.msra.mxu0 %v692
    %698 = vmatprep.subr.mxu0 0.0
    %699 = vmatpush1.msra.mxu0 %v693
    %700 = vmatprep.subr.mxu0 0.0
    %701 = vmatpush1.msra.mxu0 0.0
    %702 = vmatprep.subr.mxu0 0.0
    %703 = vmatpush1.msra.mxu0 0.0
    %704 = vmatprep.subr.mxu0 0.0
    %705 = vmatpush1.msra.mxu0 0.0
    %706 = vmatprep.subr.mxu0 0.0
    %707 = vmatpush1.msra.mxu0 0.0
    %708 = vmatprep.subr.mxu0 0.0
    %709 = vmatpush1.msra.mxu0 0.0
    %710 = vmatprep.subr.mxu0 0.0
    %711 = vmatpush1.msra.mxu0 0.0
    %712 = vmatprep.subr.mxu0 0.0
    %713 = vmatpush1.msra.mxu0 0.0
    %714 = vmatprep.subr.mxu0 0.0
    %715 = vmatpush1.msra.mxu0 0.0
    %716 = vmatprep.subr.mxu0 0.0
    %717 = vmatpush1.msra.mxu0 0.0
    %718 = vmatprep.subr.mxu0 0.0
    %719 = vmatpush1.msra.mxu0 0.0
    %720 = vmatprep.subr.mxu0 0.0
    %721 = vmatpush1.msra.mxu0 0.0
    %722 = vmatprep.subr.mxu0 0.0
    %723 = vmatpush1.msra.mxu0 0.0
    %724 = vmatprep.subr.mxu0 0.0
    %725 = vmatpush1.msra.mxu0 0.0
    %726 = vmatprep.subr.mxu0 0.0
    %727 = vmatpush1.msra.mxu0 0.0
    %728 = vmatprep.subr.mxu0 0.0
    %729 = vmatpush1.msra.mxu0 0.0
    %730 = vmatprep.subr.mxu0 0.0
    %731 = vmatpush1.msra.mxu0 0.0
    %732 = vmatprep.subr.mxu0 0.0
    %733 = vmatpush1.msra.mxu0 0.0
    %734 = vmatprep.subr.mxu0 0.0
    %735 = vmatpush1.msra.mxu0 0.0
    %736 = vmatprep.subr.mxu0 0.0
    %737 = vmatpush1.msra.mxu0 0.0
    %738 = vmatprep.subr.mxu0 0.0
    %739 = vmatpush1.msra.mxu0 0.0
    %740 = vmatprep.subr.mxu0 0.0
    %741 = vmatpush1.msra.mxu0 0.0
    %742 = vmatprep.subr.mxu0 0.0
    %743 = vmatpush1.msra.mxu0 0.0
    %744 = vmatprep.subr.mxu0 0.0
    %745 = vmatpush1.msra.mxu0 0.0
    %746 = vmatprep.subr.mxu0 0.0
    %747 = vmatpush1.msra.mxu0 0.0
    %748 = vmatprep.subr.mxu0 0.0
    %749 = vmatpush1.msra.mxu0 0.0
    %750 = vmatprep.subr.mxu0 0.0
    %751 = vmatpush1.msra.mxu0 0.0
    %752 = vmatprep.subr.mxu0 0.0
    %753 = vmatpush1.msra.mxu0 0.0
    %754 = vmatprep.subr.mxu0 0.0
    %755 = vmatpush1.msra.mxu0 0.0
    %756 = vmatprep.subr.mxu0 0.0
    %757 = vmatpush1.msra.mxu0 0.0
    %758 = vmatprep.subr.mxu0 0.0
    %759 = vmatpush1.msra.mxu0 0.0
    %760 = vmatprep.mubr.f32.mxu0 0.0
    %761 = vmatmul.mubr.f32.gmra.mrb[0].mxu0 %v276
    %v762 = vpop.f32.mrb[0].mxu0
    %v763 = vadd.f32 0.0, %v762
    %v764 = vpop.f32.mrb[0].mxu0
    %765 = vmatprep.mubr.f32.mxu0 0.0
    %766 = vmatmul.mubr.f32.gmra.mrb[0].mxu0 %v279
    %v767 = vpop.f32.mrb[0].mxu0
    %v768 = vadd.f32 0.0, %v767
    %v769 = vpop.f32.mrb[0].mxu0
    %770 = vdwg.mxu0
    %771 = vmatprep.subr.mxu0 0.0
    %772 = vmatpush1.msra.mxu0 %v694
    %773 = vmatprep.subr.mxu0 0.0
    %774 = vmatpush1.msra.mxu0 %v695
    %775 = vmatprep.subr.mxu0 0.0
    %776 = vmatpush1.msra.mxu0 0.0
    %777 = vmatprep.subr.mxu0 0.0
    %778 = vmatpush1.msra.mxu0 0.0
    %779 = vmatprep.subr.mxu0 0.0
    %780 = vmatpush1.msra.mxu0 0.0
    %781 = vmatprep.subr.mxu0 0.0
    %782 = vmatpush1.msra.mxu0 0.0
    %783 = vmatprep.subr.mxu0 0.0
    %784 = vmatpush1.msra.mxu0 0.0
    %785 = vmatprep.subr.mxu0 0.0
    %786 = vmatpush1.msra.mxu0 0.0
    %787 = vmatprep.subr.mxu0 0.0
    %788 = vmatpush1.msra.mxu0 0.0
    %789 = vmatprep.subr.mxu0 0.0
    %790 = vmatpush1.msra.mxu0 0.0
    %791 = vmatprep.subr.mxu0 0.0
    %792 = vmatpush1.msra.mxu0 0.0
    %793 = vmatprep.subr.mxu0 0.0
    %794 = vmatpush1.msra.mxu0 0.0
    %795 = vmatprep.subr.mxu0 0.0
    %796 = vmatpush1.msra.mxu0 0.0
    %797 = vmatprep.subr.mxu0 0.0
    %798 = vmatpush1.msra.mxu0 0.0
    %799 = vmatprep.subr.mxu0 0.0
    %800 = vmatpush1.msra.mxu0 0.0
    %801 = vmatprep.subr.mxu0 0.0
    %802 = vmatpush1.msra.mxu0 0.0
    %803 = vmatprep.subr.mxu0 0.0
    %804 = vmatpush1.msra.mxu0 0.0
    %805 = vmatprep.subr.mxu0 0.0
    %806 = vmatpush1.msra.mxu0 0.0
    %807 = vmatprep.subr.mxu0 0.0
    %808 = vmatpush1.msra.mxu0 0.0
    %809 = vmatprep.subr.mxu0 0.0
    %810 = vmatpush1.msra.mxu0 0.0
    %811 = vmatprep.subr.mxu0 0.0
    %812 = vmatpush1.msra.mxu0 0.0
    %813 = vmatprep.subr.mxu0 0.0
    %814 = vmatpush1.msra.mxu0 0.0
    %815 = vmatprep.subr.mxu0 0.0
    %816 = vmatpush1.msra.mxu0 0.0
    %817 = vmatprep.subr.mxu0 0.0
    %818 = vmatpush1.msra.mxu0 0.0
    %819 = vmatprep.subr.mxu0 0.0
    %820 = vmatpush1.msra.mxu0 0.0
    %821 = vmatprep.subr.mxu0 0.0
    %822 = vmatpush1.msra.mxu0 0.0
    %823 = vmatprep.subr.mxu0 0.0
    %824 = vmatpush1.msra.mxu0 0.0
    %825 = vmatprep.subr.mxu0 0.0
    %826 = vmatpush1.msra.mxu0 0.0
    %827 = vmatprep.subr.mxu0 0.0
    %828 = vmatpush1.msra.mxu0 0.0
    %829 = vmatprep.subr.mxu0 0.0
    %830 = vmatpush1.msra.mxu0 0.0
    %831 = vmatprep.subr.mxu0 0.0
    %832 = vmatpush1.msra.mxu0 0.0
    %833 = vmatprep.subr.mxu0 0.0
    %834 = vmatpush1.msra.mxu0 0.0
    %835 = vmatprep.mubr.f32.mxu0 0.0
    %836 = vmatmul.mubr.f32.gmra.mrb[0].mxu0 %v357
    %v837 = vpop.f32.mrb[0].mxu0
    %v838 = vadd.f32 0.0, %v837
    %v839 = vpop.f32.mrb[0].mxu0
    %840 = vmatprep.mubr.f32.mxu0 0.0
    %841 = vmatmul.mubr.f32.gmra.mrb[0].mxu0 %v360
    %v842 = vpop.f32.mrb[0].mxu0
    %v843 = vadd.f32 0.0, %v842
    %v844 = vpop.f32.mrb[0].mxu0
    %845 = vdwg.mxu0
    %846 = vmatprep.subr.mxu0 %v69
    %847 = vmatpush1.msra.mxu0 %v68
    %848 = vmatprep.subr.mxu0 %v71
    %849 = vmatpush1.msra.mxu0 %v70
    %850 = vmatprep.subr.mxu0 %v73
    %851 = vmatpush1.msra.mxu0 %v72
    %852 = vmatprep.subr.mxu0 %v75
    %853 = vmatpush1.msra.mxu0 %v74
    %854 = vmatprep.subr.mxu0 %v77
    %855 = vmatpush1.msra.mxu0 %v76
    %856 = vmatprep.subr.mxu0 %v79
    %857 = vmatpush1.msra.mxu0 %v78
    %858 = vmatprep.subr.mxu0 %v81
    %859 = vmatpush1.msra.mxu0 %v80
    %860 = vmatprep.subr.mxu0 %v83
    %861 = vmatpush1.msra.mxu0 %v82
    %862 = vmatprep.subr.mxu0 %v85
    %863 = vmatpush1.msra.mxu0 %v84
    %864 = vmatprep.subr.mxu0 %v87
    %865 = vmatpush1.msra.mxu0 %v86
    %866 = vmatprep.subr.mxu0 %v89
    %867 = vmatpush1.msra.mxu0 %v88
    %868 = vmatprep.subr.mxu0 %v91
    %869 = vmatpush1.msra.mxu0 %v90
    %870 = vmatprep.subr.mxu0 %v93
    %871 = vmatpush1.msra.mxu0 %v92
    %872 = vmatprep.subr.mxu0 %v95
    %873 = vmatpush1.msra.mxu0 %v94
    %874 = vmatprep.subr.mxu0 %v97
    %875 = vmatpush1.msra.mxu0 %v96
    %876 = vmatprep.subr.mxu0 %v99
    %877 = vmatpush1.msra.mxu0 %v98
    %878 = vmatprep.subr.mxu0 %v101
    %879 = vmatpush1.msra.mxu0 %v100
    %880 = vmatprep.subr.mxu0 %v103
    %881 = vmatpush1.msra.mxu0 %v102
    %882 = vmatprep.subr.mxu0 %v105
    %883 = vmatpush1.msra.mxu0 %v104
    %884 = vmatprep.subr.mxu0 %v107
    %885 = vmatpush1.msra.mxu0 %v106
    %886 = vmatprep.subr.mxu0 %v109
    %887 = vmatpush1.msra.mxu0 %v108
    %888 = vmatprep.subr.mxu0 %v111
    %889 = vmatpush1.msra.mxu0 %v110
    %890 = vmatprep.subr.mxu0 %v113
    %891 = vmatpush1.msra.mxu0 %v112
    %892 = vmatprep.subr.mxu0 %v115
    %893 = vmatpush1.msra.mxu0 %v114
    %894 = vmatprep.subr.mxu0 %v117
    %895 = vmatpush1.msra.mxu0 %v116
    %896 = vmatprep.subr.mxu0 %v119
    %897 = vmatpush1.msra.mxu0 %v118
    %898 = vmatprep.subr.mxu0 %v121
    %899 = vmatpush1.msra.mxu0 %v120
    %900 = vmatprep.subr.mxu0 %v123
    %901 = vmatpush1.msra.mxu0 %v122
    %902 = vmatprep.subr.mxu0 %v125
    %903 = vmatpush1.msra.mxu0 %v124
    %904 = vmatprep.subr.mxu0 %v127
    %905 = vmatpush1.msra.mxu0 %v126
    %906 = vmatprep.subr.mxu0 %v129
    %907 = vmatpush1.msra.mxu0 %v128
    %908 = vmatprep.subr.mxu0 %v131
    %909 = vmatpush1.msra.mxu0 %v130
    %910 = vmatprep.mubr.f32.mxu0 %v692
    %911 = vmatmul.mubr.f32.gmra.mrb[0].mxu0 %v763
    %v912 = vpop.f32.mrb[0].mxu0
    %v913 = vadd.f32 %v441, %v912
    %v914 = vpop.f32.mrb[0].mxu0
    %v915 = vadd.f32 %v445, %v914
    %916 = vmatprep.mubr.f32.mxu0 %v693
    %917 = vmatmul.mubr.f32.gmra.mrb[0].mxu0 %v768
    %v918 = vpop.f32.mrb[0].mxu0
    %v919 = vadd.f32 %v441, %v918
    %v920 = vpop.f32.mrb[0].mxu0
    %v921 = vadd.f32 %v445, %v920
    %922 = vmatprep.mubr.f32.mxu0 %v694
    %923 = vmatmul.mubr.f32.gmra.mrb[0].mxu0 %v838
    %v924 = vpop.f32.mrb[0].mxu0
    %v925 = vadd.f32 %v441, %v924
    %v926 = vpop.f32.mrb[0].mxu0
    %v927 = vadd.f32 %v445, %v926
    %928 = vmatprep.mubr.f32.mxu0 %v695
    %929 = vmatmul.mubr.f32.gmra.mrb[0].mxu0 %v843
    %v930 = vpop.f32.mrb[0].mxu0
    %v931 = vadd.f32 %v441, %v930
    %v932 = vpop.f32.mrb[0].mxu0
    %v933 = vadd.f32 %v445, %v932
    %934 = vdwg.mxu0
    %v935 = vxor.u32 %v913, 2147483648
    %v936 = vxor.u32 %v915, 2147483648
    %v937 = vxor.u32 %v919, 2147483648
    %v938 = vxor.u32 %v921, 2147483648
    %v939 = vxor.u32 %v925, 2147483648
    %v940 = vxor.u32 %v927, 2147483648
    %v941 = vxor.u32 %v931, 2147483648
    %v942 = vxor.u32 %v933, 2147483648
    %v943 = vmul.f32 %v935, 1.442695
    %v944 = vpow.pop %v943
    %v945 = vmul.f32 %v936, 1.442695
    %v946 = vpow.pop %v945
    %v947 = vmul.f32 %v937, 1.442695
    %v948 = vpow.pop %v947
    %v949 = vmul.f32 %v938, 1.442695
    %v950 = vpow.pop %v949
    %v951 = vmul.f32 %v939, 1.442695
    %v952 = vpow.pop %v951
    %v953 = vmul.f32 %v940, 1.442695
    %v954 = vpow.pop %v953
    %v955 = vmul.f32 %v941, 1.442695
    %v956 = vpow.pop %v955
    %v957 = vmul.f32 %v942, 1.442695
    %v958 = vpow.pop %v957
    %v959 = vadd.f32 %v944, 1.0
    %v960 = vadd.f32 %v946, 1.0
    %v961 = vadd.f32 %v948, 1.0
    %v962 = vadd.f32 %v950, 1.0
    %v963 = vadd.f32 %v952, 1.0
    %v964 = vadd.f32 %v954, 1.0
    %v965 = vadd.f32 %v956, 1.0
    %v966 = vadd.f32 %v958, 1.0
    %v967 = vrcp.pop %v959
    %v968 = vmul.f32 1.0, %v967
    %v969 = vrcp.pop %v960
    %v970 = vmul.f32 1.0, %v969
    %v971 = vrcp.pop %v961
    %v972 = vmul.f32 1.0, %v971
    %v973 = vrcp.pop %v962
    %v974 = vmul.f32 1.0, %v973
    %v975 = vrcp.pop %v963
    %v976 = vmul.f32 1.0, %v975
    %v977 = vrcp.pop %v964
    %v978 = vmul.f32 1.0, %v977
    %v979 = vrcp.pop %v965
    %v980 = vmul.f32 1.0, %v979
    %v981 = vrcp.pop %v966
    %v982 = vmul.f32 1.0, %v981
    %v983 = vmul.f32 %v970, %v692
    %v984 = vmul.f32 %v974, %v693
    %v985 = vmul.f32 %v978, %v694
    %v986 = vmul.f32 %v982, %v695
    %987 = vmatprep.subr.mxu0 0.0
    %988 = vmatpush1.msra.mxu0 %v133
    %989 = vmatprep.subr.mxu0 0.0
    %990 = vmatpush1.msra.mxu0 %v134
    %991 = vmatprep.subr.mxu0 0.0
    %992 = vmatpush1.msra.mxu0 %v135
    %993 = vmatprep.subr.mxu0 0.0
    %994 = vmatpush1.msra.mxu0 %v136
    %995 = vmatprep.subr.mxu0 0.0
    %996 = vmatpush1.msra.mxu0 %v137
    %997 = vmatprep.subr.mxu0 0.0
    %998 = vmatpush1.msra.mxu0 %v138
    %999 = vmatprep.subr.mxu0 0.0
    %1000 = vmatpush1.msra.mxu0 %v139
    %1001 = vmatprep.subr.mxu0 0.0
    %1002 = vmatpush1.msra.mxu0 %v140
    %1003 = vmatprep.subr.mxu0 0.0
    %1004 = vmatpush1.msra.mxu0 %v141
    %1005 = vmatprep.subr.mxu0 0.0
    %1006 = vmatpush1.msra.mxu0 %v142
    %1007 = vmatprep.subr.mxu0 0.0
    %1008 = vmatpush1.msra.mxu0 %v143
    %1009 = vmatprep.subr.mxu0 0.0
    %1010 = vmatpush1.msra.mxu0 %v144
    %1011 = vmatprep.subr.mxu0 0.0
    %1012 = vmatpush1.msra.mxu0 %v145
    %1013 = vmatprep.subr.mxu0 0.0
    %1014 = vmatpush1.msra.mxu0 %v146
    %1015 = vmatprep.subr.mxu0 0.0
    %1016 = vmatpush1.msra.mxu0 %v147
    %1017 = vmatprep.subr.mxu0 0.0
    %1018 = vmatpush1.msra.mxu0 %v148
    %1019 = vmatprep.subr.mxu0 0.0
    %1020 = vmatpush1.msra.mxu0 %v149
    %1021 = vmatprep.subr.mxu0 0.0
    %1022 = vmatpush1.msra.mxu0 %v150
    %1023 = vmatprep.subr.mxu0 0.0
    %1024 = vmatpush1.msra.mxu0 %v151
    %1025 = vmatprep.subr.mxu0 0.0
    %1026 = vmatpush1.msra.mxu0 %v152
    %1027 = vmatprep.subr.mxu0 0.0
    %1028 = vmatpush1.msra.mxu0 %v153
    %1029 = vmatprep.subr.mxu0 0.0
    %1030 = vmatpush1.msra.mxu0 %v154
    %1031 = vmatprep.subr.mxu0 0.0
    %1032 = vmatpush1.msra.mxu0 %v155
    %1033 = vmatprep.subr.mxu0 0.0
    %1034 = vmatpush1.msra.mxu0 %v156
    %1035 = vmatprep.subr.mxu0 0.0
    %1036 = vmatpush1.msra.mxu0 %v157
    %1037 = vmatprep.subr.mxu0 0.0
    %1038 = vmatpush1.msra.mxu0 %v158
    %1039 = vmatprep.subr.mxu0 0.0
    %1040 = vmatpush1.msra.mxu0 %v159
    %1041 = vmatprep.subr.mxu0 0.0
    %1042 = vmatpush1.msra.mxu0 %v160
    %1043 = vmatprep.subr.mxu0 0.0
    %1044 = vmatpush1.msra.mxu0 %v161
    %1045 = vmatprep.subr.mxu0 0.0
    %1046 = vmatpush1.msra.mxu0 %v162
    %1047 = vmatprep.subr.mxu0 0.0
    %1048 = vmatpush1.msra.mxu0 %v163
    %1049 = vmatprep.subr.mxu0 0.0
    %1050 = vmatpush1.msra.mxu0 %v164
    %1051 = vmatprep.mubr.f32.mxu0 %v983
    %1052 = vmatmul.mubr.f32.gmra.mrb[0].mxu0 %v763
    %v1053 = vpop.f32.mrb[0].mxu0
    %v1054 = vadd.f32 %v593, %v1053
    %v1055 = vpop.f32.mrb[0].mxu0
    %1056 = vmatprep.mubr.f32.mxu0 %v984
    %1057 = vmatmul.mubr.f32.gmra.mrb[0].mxu0 %v768
    %v1058 = vpop.f32.mrb[0].mxu0
    %v1059 = vadd.f32 %v593, %v1058
    %v1060 = vpop.f32.mrb[0].mxu0
    %1061 = vmatprep.mubr.f32.mxu0 %v985
    %1062 = vmatmul.mubr.f32.gmra.mrb[0].mxu0 %v838
    %v1063 = vpop.f32.mrb[0].mxu0
    %v1064 = vadd.f32 %v593, %v1063
    %v1065 = vpop.f32.mrb[0].mxu0
    %1066 = vmatprep.mubr.f32.mxu0 %v986
    %1067 = vmatmul.mubr.f32.gmra.mrb[0].mxu0 %v843
    %v1068 = vpop.f32.mrb[0].mxu0
    %v1069 = vadd.f32 %v593, %v1068
    %v1070 = vpop.f32.mrb[0].mxu0
    %1071 = vdwg.mxu0
    %v1072 = vtanh.pop %v1054
    %v1073 = vtanh.pop %v1059
    %v1074 = vtanh.pop %v1064
    %v1075 = vtanh.pop %v1069
    %v1076 = vsub.f32 %v1072, %v692
    %v1077 = vsub.f32 %v1073, %v693
    %v1078 = vsub.f32 %v1074, %v694
    %v1079 = vsub.f32 %v1075, %v695
    %v1080 = vmul.f32 %v968, %v1076
    %v1081 = vmul.f32 %v972, %v1077
    %v1082 = vmul.f32 %v976, %v1078
    %v1083 = vmul.f32 %v980, %v1079
    %v1084 = vadd.f32 %v692, %v1080
    %v1085 = vadd.f32 %v693, %v1081
    %v1086 = vadd.f32 %v694, %v1082
    %v1087 = vadd.f32 %v695, %v1083
    %1088 = vst [vmem:[#allocation7] sm:$0xff] %v1084
    %1089 = vst [vmem:[#allocation7 + $0x8] sm:$0xff] %v1085
    %1090 = vst [vmem:[#allocation7 + $0x10] sm:$0xff] %v1086
    %1091 = vst [vmem:[#allocation7 + $0x18] sm:$0xff] %v1087
    // Predicated region
    $region42: #{graph_layer_forward.1} parent=1 // pred_check
      _
    $region43: #{graph_layer_forward.1} parent=1 // pred_check_branch
      %1093 = sbr.rel (0) target = $region45
    $region44: #{graph_layer_forward.1} parent=1 // pred_region
      %s1095 = ssub.s32 512, 512
      %1096 = vsyncadd [#allocation4], %s1095
      %s1097 = sshll.u32 [#allocation7], 4
      %s1098 = int_to_ptr.vmem [resolvable:$true] %s1097
      %1103 = dma.vmem_to_hbm [thread:$0]  %s1098, 512, %s8, [#allocation4], 128, 128, 8
    $region45: #{graph_layer_forward.1} parent=1 // pred_fallthru
      _
    // Predicated region
    $region46: #{graph_layer_forward.1} parent=1 // pred_check
      _
    $region47: #{graph_layer_forward.1} parent=1 // pred_check_branch
      %1105 = sbr.rel (0) target = $region49
    $region48: #{graph_layer_forward.1} parent=1 // pred_region
      %1106 = dma.done [#allocation4], 512
    $region49: #{graph_layer_forward.1} parent=1 // pred_fallthru
      _
    %1107 = vsyncpa [#allocation3], 1
    %1108 = vsyncpa [#allocation6], 1
    %1109 = vsyncpa [#allocation4], 1

</llo_original>
